<compile_context>
chip_gen: v7x
topology: tpu7x:2x2x1
jax: 0.10.0
libtpu: 0.0.40
codegen_flags: <defaults>
</compile_context>

<pallas_src>
import functools

import jax
import jax.numpy as jnp
from jax import lax
from jax.experimental import pallas as pl
from jax.experimental.pallas import tpu as pltpu

# Layer sizes from the PyTorch module.
H1, H2, H3, H4 = 45, 23, 12, 1


def _mlp_kernel(x_ref, w1_ref, b1_ref, w2_ref, b2_ref,
                w3_ref, b3_ref, w4_ref, b4_ref, o_ref):
    """Whole forward pass for one batch tile, transposed-activation layout.

    x_ref:  [bt, F]    f32 (native layout tile, cast to compute dtype here)
    wN_ref: [out, in]  compute dtype (PyTorch [out, in] layout)
    bN_ref: [out, 1]   f32
    o_ref:  [1,  bt]   f32  -- lane-dense output block.
    """
    cdt = w1_ref.dtype                      # MXU input dtype (bf16 by default)
    x = x_ref[...].astype(cdt)              # in-kernel cast, no extra HBM pass

    # Layer 1: contract w1 dim 1 with x dim 1 -> h^T of shape [H1, bt].
    h = lax.dot_general(
        w1_ref[...], x,
        dimension_numbers=(((1,), (1,)), ((), ())),
        preferred_element_type=jnp.float32)
    h = jnp.maximum(h + b1_ref[...], 0.0)

    # Layer 2: [H2, H1] @ [H1, bt] -> [H2, bt]
    h = jnp.dot(w2_ref[...], h.astype(cdt), preferred_element_type=jnp.float32)
    h = jnp.maximum(h + b2_ref[...], 0.0)

    # Layer 3: [H3, H2] @ [H2, bt] -> [H3, bt]
    h = jnp.dot(w3_ref[...], h.astype(cdt), preferred_element_type=jnp.float32)
    h = jnp.maximum(h + b3_ref[...], 0.0)

    # Layer 4: [1, H3] @ [H3, bt] -> [1, bt]; PyTorch applies ReLU on fc4 too.
    h = jnp.dot(w4_ref[...], h.astype(cdt), preferred_element_type=jnp.float32)
    h = jnp.maximum(h + b4_ref[...], 0.0)

    o_ref[...] = h.astype(o_ref.dtype)      # lane-dense (1, bt) store


@functools.partial(jax.jit, static_argnames=("batch_tile", "compute_dtype"))
def feedforward_nn(x, params, batch_tile=2048, compute_dtype=jnp.bfloat16):
    """x: [B, F] float32.  params: wN [out, in] f32, bN [out, 1] f32.

    Returns [B, 1] float32, matching the PyTorch module's forward().
    For v7x, pick batch_tile so that cdiv(B, batch_tile) >= 2 (parallel grid
    axis lets both TensorCores split the batch).
    """
    B, F = x.shape
    assert batch_tile % 128 == 0, "batch_tile must be a multiple of 128 lanes"
    bt = batch_tile

    num_tiles = pl.cdiv(B, bt)
    B_pad = num_tiles * bt
    if B_pad != B:
        x = jnp.pad(x, ((0, B_pad - B), (0, 0)))   # padded rows sliced off below

    w1 = params["w1"].astype(compute_dtype); b1 = params["b1"]
    w2 = params["w2"].astype(compute_dtype); b2 = params["b2"]
    w3 = params["w3"].astype(compute_dtype); b3 = params["b3"]
    w4 = params["w4"].astype(compute_dtype); b4 = params["b4"]

    def rep(arr):
        # Replicated full block (weights/biases): constant block index -> no
        # re-DMA per grid step.  Total weights ~10 KB.
        return pl.BlockSpec(arr.shape, lambda i: (0, 0))

    wsize = jnp.dtype(compute_dtype).itemsize
    n_w = F * H1 + H1 * H2 + H2 * H3 + H3 * H4
    n_b = H1 + H2 + H3 + H4
    cost = pl.CostEstimate(
        flops=int(2 * B_pad * n_w),
        transcendentals=0,
        bytes_accessed=int(4 * B_pad * F + 4 * B_pad + wsize * n_w + 4 * n_b),
    )

    out_t = pl.pallas_call(
        _mlp_kernel,
        out_shape=jax.ShapeDtypeStruct((H4, B_pad), jnp.float32),
        grid_spec=pltpu.PrefetchScalarGridSpec(
            num_scalar_prefetch=0,
            grid=(num_tiles,),
            in_specs=[
                # x tile in native layout: contiguous HBM DMA, no wrapper pass.
                pl.BlockSpec((bt, F), lambda i: (i, 0)),
                rep(w1), rep(b1),
                rep(w2), rep(b2),
                rep(w3), rep(b3),
                rep(w4), rep(b4),
            ],
            out_specs=pl.BlockSpec((H4, bt), lambda i: (0, i)),  # (1, bt) blocks
        ),
        compiler_params=pltpu.CompilerParams(
            dimension_semantics=("parallel",)),
        cost_estimate=cost,
    )(x, w1, b1, w2, b2, w3, b3, w4, b4)

    if B_pad == B:
        # (1, B) -> (B, 1): identical row-major layout, free reshape.
        return out_t.reshape(B, 1)
    return out_t[0, :B].reshape(B, 1)


def init_params(key, input_features):
    """Deterministic init matching nn.Linear's U(-1/sqrt(in), 1/sqrt(in)).

    Weights stored as [out, in] (PyTorch layout), biases as [out, 1] columns.
    """
    sizes = [(input_features, H1), (H1, H2), (H2, H3), (H3, H4)]
    params = {}
    for idx, (fin, fout) in enumerate(sizes, start=1):
        key, kw, kb = jax.random.split(key, 3)
        bound = 1.0 / jnp.sqrt(jnp.float32(fin))
        params[f"w{idx}"] = jax.random.uniform(
            kw, (fout, fin), jnp.float32, -bound, bound)
        params[f"b{idx}"] = jax.random.uniform(
            kb, (fout, 1), jnp.float32, -bound, bound)
    return params


def reference_forward(x, params, compute_dtype=jnp.float32):
    """Pure-JAX reference.  compute_dtype=float32 is the true PyTorch forward;
    compute_dtype=bfloat16 mirrors the kernel's default dtype handling."""
    h = x
    for i in (1, 2, 3, 4):
        w = params[f"w{i}"].astype(compute_dtype)
        b = params[f"b{i}"]
        h = jnp.dot(h.astype(compute_dtype), w.T,
                    preferred_element_type=jnp.float32,
                    precision=lax.Precision.HIGHEST)
        h = jnp.maximum(h + b.reshape(1, -1), 0.0)   # ReLU on every layer
    return h  # [B, 1] f32


if __name__ == "__main__":
    key = jax.random.PRNGKey(0)
    input_features = 10
    batch = 1000           # not a multiple of the tile: exercises padding
    bt = 512               # 2 grid tiles at B=1000 (keeps v7x's 2 TCs busy)

    kp, kx = jax.random.split(key)
    params = init_params(kp, input_features)
    x = jax.random.normal(kx, (batch, input_features), jnp.float32)

    ref_f32 = reference_forward(x, params, compute_dtype=jnp.float32)
    ref_bf16 = reference_forward(x, params, compute_dtype=jnp.bfloat16)

    # Default bf16-MXU path.
    out_bf = jax.block_until_ready(feedforward_nn(x, params, batch_tile=bt))
    assert out_bf.shape == (batch, 1), out_bf.shape
    # Kernel correctness vs. a dtype-mirrored reference (tight).
    assert jnp.allclose(out_bf, ref_bf16, atol=2e-3, rtol=2e-3), \
        "bf16 kernel mismatch vs bf16-mirrored reference"
    # Documented bf16 drift vs. the true f32 PyTorch forward (loose).
    assert jnp.allclose(out_bf, ref_f32, atol=5e-2, rtol=5e-2), \
        "bf16 kernel drift vs f32 reference exceeds expected bound"

    # Full-precision path vs. the true f32 forward.
    out_f32 = jax.block_until_ready(
        feedforward_nn(x, params, batch_tile=bt, compute_dtype=jnp.float32))
    assert jnp.allclose(out_f32, ref_f32, atol=5e-3, rtol=5e-3), \
        "f32 kernel mismatch vs f32 reference"

    print("KERNEL_OK")
</pallas_src>

<mosaic_0001>
module attributes {stable_mosaic.version = 11 : i64} {
  func.func @_mlp_kernel(%arg0: i32, %arg1: memref<512x10xf32, #tpu.memory_space<vmem>>, %arg2: memref<45x10xbf16, #tpu.memory_space<vmem>>, %arg3: memref<45x1xf32, #tpu.memory_space<vmem>>, %arg4: memref<23x45xbf16, #tpu.memory_space<vmem>>, %arg5: memref<23x1xf32, #tpu.memory_space<vmem>>, %arg6: memref<12x23xbf16, #tpu.memory_space<vmem>>, %arg7: memref<12x1xf32, #tpu.memory_space<vmem>>, %arg8: memref<1x12xbf16, #tpu.memory_space<vmem>>, %arg9: memref<1x1xf32, #tpu.memory_space<vmem>>, %arg10: memref<1x512xf32, #tpu.memory_space<vmem>>) attributes {dimension_semantics = [#tpu.dimension_semantics<parallel>], iteration_bounds = array<i64: 2>, scalar_prefetch = 0 : i64, scratch_operands = 0 : i64, tpu.core_type = #tpu.core_type<tc>, window_params = [{transform_indices = @transform_0, window_bounds = array<i64: 512, 10>}, {pipeline_mode = #tpu.pipeline_mode<synchronous>, transform_indices = @transform_1, window_bounds = array<i64: 45, 10>}, {pipeline_mode = #tpu.pipeline_mode<synchronous>, transform_indices = @transform_2, window_bounds = array<i64: 45, 1>}, {pipeline_mode = #tpu.pipeline_mode<synchronous>, transform_indices = @transform_3, window_bounds = array<i64: 23, 45>}, {pipeline_mode = #tpu.pipeline_mode<synchronous>, transform_indices = @transform_4, window_bounds = array<i64: 23, 1>}, {pipeline_mode = #tpu.pipeline_mode<synchronous>, transform_indices = @transform_5, window_bounds = array<i64: 12, 23>}, {pipeline_mode = #tpu.pipeline_mode<synchronous>, transform_indices = @transform_6, window_bounds = array<i64: 12, 1>}, {pipeline_mode = #tpu.pipeline_mode<synchronous>, transform_indices = @transform_7, window_bounds = array<i64: 1, 12>}, {pipeline_mode = #tpu.pipeline_mode<synchronous>, transform_indices = @transform_8, window_bounds = array<i64: 1, 1>}, {transform_indices = @transform_9, window_bounds = array<i64: 1, 512>}]} {
    %c0 = arith.constant 0 : index
    %c0_0 = arith.constant 0 : index
    %0 = vector.load %arg1[%c0, %c0_0] : memref<512x10xf32, #tpu.memory_space<vmem>>, vector<512x10xf32>
    %1 = arith.truncf %0 : vector<512x10xf32> to vector<512x10xbf16>
    %c0_1 = arith.constant 0 : index
    %c0_2 = arith.constant 0 : index
    %2 = vector.load %arg2[%c0_1, %c0_2] : memref<45x10xbf16, #tpu.memory_space<vmem>>, vector<45x10xbf16>
    %cst = arith.constant dense<0.000000e+00> : vector<45x512xf32>
    %3 = tpu.matmul %2, %1, %cst {dimension_numbers = #tpu.dot_dimension_numbers<[1], [1], [0], [0], [0, 0, 1, 0], [], []>} : vector<45x10xbf16>, vector<512x10xbf16>, vector<45x512xf32> -> vector<45x512xf32>
    %c0_3 = arith.constant 0 : index
    %c0_4 = arith.constant 0 : index
    %4 = vector.load %arg3[%c0_3, %c0_4] : memref<45x1xf32, #tpu.memory_space<vmem>>, vector<45x1xf32>
    %5 = vector.broadcast %4 : vector<45x1xf32> to vector<45x512xf32>
    %6 = arith.addf %3, %5 : vector<45x512xf32>
    %cst_5 = arith.constant 0.000000e+00 : f32
    %7 = vector.broadcast %cst_5 : f32 to vector<45x512xf32>
    %8 = arith.maximumf %6, %7 : vector<45x512xf32>
    %c0_6 = arith.constant 0 : index
    %c0_7 = arith.constant 0 : index
    %9 = vector.load %arg4[%c0_6, %c0_7] : memref<23x45xbf16, #tpu.memory_space<vmem>>, vector<23x45xbf16>
    %10 = arith.truncf %8 : vector<45x512xf32> to vector<45x512xbf16>
    %cst_8 = arith.constant dense<0.000000e+00> : vector<23x512xf32>
    %11 = tpu.matmul %9, %10, %cst_8 {dimension_numbers = #tpu.dot_dimension_numbers<[1], [0], [0], [1], [0, 0, 1, 1], [], []>} : vector<23x45xbf16>, vector<45x512xbf16>, vector<23x512xf32> -> vector<23x512xf32>
    %c0_9 = arith.constant 0 : index
    %c0_10 = arith.constant 0 : index
    %12 = vector.load %arg5[%c0_9, %c0_10] : memref<23x1xf32, #tpu.memory_space<vmem>>, vector<23x1xf32>
    %13 = vector.broadcast %12 : vector<23x1xf32> to vector<23x512xf32>
    %14 = arith.addf %11, %13 : vector<23x512xf32>
    %cst_11 = arith.constant 0.000000e+00 : f32
    %15 = vector.broadcast %cst_11 : f32 to vector<23x512xf32>
    %16 = arith.maximumf %14, %15 : vector<23x512xf32>
    %c0_12 = arith.constant 0 : index
    %c0_13 = arith.constant 0 : index
    %17 = vector.load %arg6[%c0_12, %c0_13] : memref<12x23xbf16, #tpu.memory_space<vmem>>, vector<12x23xbf16>
    %18 = arith.truncf %16 : vector<23x512xf32> to vector<23x512xbf16>
    %cst_14 = arith.constant dense<0.000000e+00> : vector<12x512xf32>
    %19 = tpu.matmul %17, %18, %cst_14 {dimension_numbers = #tpu.dot_dimension_numbers<[1], [0], [0], [1], [0, 0, 1, 1], [], []>} : vector<12x23xbf16>, vector<23x512xbf16>, vector<12x512xf32> -> vector<12x512xf32>
    %c0_15 = arith.constant 0 : index
    %c0_16 = arith.constant 0 : index
    %20 = vector.load %arg7[%c0_15, %c0_16] : memref<12x1xf32, #tpu.memory_space<vmem>>, vector<12x1xf32>
    %21 = vector.broadcast %20 : vector<12x1xf32> to vector<12x512xf32>
    %22 = arith.addf %19, %21 : vector<12x512xf32>
    %cst_17 = arith.constant 0.000000e+00 : f32
    %23 = vector.broadcast %cst_17 : f32 to vector<12x512xf32>
    %24 = arith.maximumf %22, %23 : vector<12x512xf32>
    %c0_18 = arith.constant 0 : index
    %c0_19 = arith.constant 0 : index
    %25 = vector.load %arg8[%c0_18, %c0_19] : memref<1x12xbf16, #tpu.memory_space<vmem>>, vector<1x12xbf16>
    %26 = arith.truncf %24 : vector<12x512xf32> to vector<12x512xbf16>
    %cst_20 = arith.constant dense<0.000000e+00> : vector<1x512xf32>
    %27 = tpu.matmul %25, %26, %cst_20 {dimension_numbers = #tpu.dot_dimension_numbers<[1], [0], [0], [1], [0, 0, 1, 1], [], []>} : vector<1x12xbf16>, vector<12x512xbf16>, vector<1x512xf32> -> vector<1x512xf32>
    %c0_21 = arith.constant 0 : index
    %c0_22 = arith.constant 0 : index
    %28 = vector.load %arg9[%c0_21, %c0_22] : memref<1x1xf32, #tpu.memory_space<vmem>>, vector<1x1xf32>
    %29 = vector.broadcast %28 : vector<1x1xf32> to vector<1x512xf32>
    %30 = arith.addf %27, %29 : vector<1x512xf32>
    %cst_23 = arith.constant 0.000000e+00 : f32
    %31 = vector.broadcast %cst_23 : f32 to vector<1x512xf32>
    %32 = arith.maximumf %30, %31 : vector<1x512xf32>
    %c0_24 = arith.constant 0 : index
    %c0_25 = arith.constant 0 : index
    %33 = vector.load %arg10[%c0_24, %c0_25] : memref<1x512xf32, #tpu.memory_space<vmem>>, vector<1x512xf32>
    tpu.vector_store %arg10[%c0_24, %c0_25], %32 {strides = array<i32>} : memref<1x512xf32, #tpu.memory_space<vmem>>, vector<1x512xf32>,
    return
  }
  func.func @transform_0(%arg0: i32) -> (i32, i32) {
    %c0_i32 = arith.constant 0 : i32
    %c0_i32_0 = arith.constant 0 : i32
    return %arg0, %c0_i32 : i32, i32
  }
  func.func @transform_1(%arg0: i32) -> (i32, i32) {
    %c0_i32 = arith.constant 0 : i32
    %c0_i32_0 = arith.constant 0 : i32
    %c0_i32_1 = arith.constant 0 : i32
    return %c0_i32, %c0_i32_0 : i32, i32
  }
  func.func @transform_2(%arg0: i32) -> (i32, i32) {
    %c0_i32 = arith.constant 0 : i32
    %c0_i32_0 = arith.constant 0 : i32
    %c0_i32_1 = arith.constant 0 : i32
    return %c0_i32, %c0_i32_0 : i32, i32
  }
  func.func @transform_3(%arg0: i32) -> (i32, i32) {
    %c0_i32 = arith.constant 0 : i32
    %c0_i32_0 = arith.constant 0 : i32
    %c0_i32_1 = arith.constant 0 : i32
    return %c0_i32, %c0_i32_0 : i32, i32
  }
  func.func @transform_4(%arg0: i32) -> (i32, i32) {
    %c0_i32 = arith.constant 0 : i32
    %c0_i32_0 = arith.constant 0 : i32
    %c0_i32_1 = arith.constant 0 : i32
    return %c0_i32, %c0_i32_0 : i32, i32
  }
  func.func @transform_5(%arg0: i32) -> (i32, i32) {
    %c0_i32 = arith.constant 0 : i32
    %c0_i32_0 = arith.constant 0 : i32
    %c0_i32_1 = arith.constant 0 : i32
    return %c0_i32, %c0_i32_0 : i32, i32
  }
  func.func @transform_6(%arg0: i32) -> (i32, i32) {
    %c0_i32 = arith.constant 0 : i32
    %c0_i32_0 = arith.constant 0 : i32
    %c0_i32_1 = arith.constant 0 : i32
    return %c0_i32, %c0_i32_0 : i32, i32
  }
  func.func @transform_7(%arg0: i32) -> (i32, i32) {
    %c0_i32 = arith.constant 0 : i32
    %c0_i32_0 = arith.constant 0 : i32
    %c0_i32_1 = arith.constant 0 : i32
    return %c0_i32, %c0_i32_0 : i32, i32
  }
  func.func @transform_8(%arg0: i32) -> (i32, i32) {
    %c0_i32 = arith.constant 0 : i32
    %c0_i32_0 = arith.constant 0 : i32
    %c0_i32_1 = arith.constant 0 : i32
    return %c0_i32, %c0_i32_0 : i32, i32
  }
  func.func @transform_9(%arg0: i32) -> (i32, i32) {
    %c0_i32 = arith.constant 0 : i32
    %c0_i32_0 = arith.constant 0 : i32
    return %c0_i32, %arg0 : i32, i32
  }
}

</mosaic_0001>

<llo_original>
// kernel: feedforward_nn.1
$region0: #{feedforward_nn.1}
  #allocation0 [shape = 'u32[]', space=smem, size = 0x4, offset = 0x4, fixed_abs, tag = 'smem constant byte address 0x4 - core index']
  #allocation1 [shape = 'u32[144,128]{1,0:T(1,128)}', space=vmem, size = 0x12000, scoped, tag = 'internal scratch']
  #allocation2 [shape = 'f32[1,1]{1,0:T(1,128)S(1)}', space=vmem, size = 0x200, scoped, tag = 'scoped memory for feedforward_nn.1']
  %s0 = inlined_call_operand.vmem [shape: f32[1024,10], index: 0, kind: input, shape index: {}]
  %s1 = inlined_call_operand.vmem [shape: bf16[45,10], index: 1, kind: input, shape index: {}]
  %s2 = inlined_call_operand.vmem [shape: f32[45,1], index: 2, kind: input, shape index: {}]
  %s3 = inlined_call_operand.vmem [shape: bf16[23,45], index: 3, kind: input, shape index: {}]
  %s4 = inlined_call_operand.vmem [shape: f32[23,1], index: 4, kind: input, shape index: {}]
  %s5 = inlined_call_operand.vmem [shape: bf16[12,23], index: 5, kind: input, shape index: {}]
  %s6 = inlined_call_operand.vmem [shape: f32[12,1], index: 6, kind: input, shape index: {}]
  %s7 = inlined_call_operand.vmem [shape: bf16[1,12], index: 7, kind: input, shape index: {}]
  %s8 = inlined_call_operand.<no memory space> [shape: f32[1,1], index: 8, kind: input, shape index: {}]
  %s9 = inlined_call_operand.vmem [shape: f32[1,1024], index: 9, kind: output, shape index: {}]
  %s10 = sld [smem:[#allocation0]]
  $region69: #{feedforward_nn.1} parent=0
    _
  %s12 = ssub.s32 1, %s10
  %s13 = scalar_select 0, %s12, %s10
  %v14 = vstv %s8
  %15 = vst [vmem:[#allocation2] sm:$0x1] %v14
  loop: start=0, step=1, limit=4
  $region2: #{feedforward_nn.1} parent=0 // loop_pre_header
    _
  $region3: #{feedforward_nn.1} parent=0 // loop_header
    %s17 = sphi 0, %s21
    %p18 = scmp.ge.s32.totalorder %s17, 4
    %s27 = sphi 0, %s29
    %s30 = sphi 0, %s27
    %s31 = sphi 0, %s30
    %s47 = sphi 0, %s31
    %s51 = sphi 0, %s51
    %s53 = sphi 0, %s51
    %s54 = sphi 0, %s53
    %s68 = sphi 0, %s54
    %s72 = sphi 0, %s72
    %s74 = sphi 0, %s72
    %s75 = sphi 0, %s74
    %s89 = sphi 0, %s75
    %s93 = sphi 0, %s93
    %s95 = sphi 0, %s93
    %s96 = sphi 0, %s95
    %s110 = sphi 0, %s96
    %s114 = sphi 0, %s114
    %s116 = sphi 0, %s114
    %s117 = sphi 0, %s116
    %s131 = sphi 0, %s117
    %s135 = sphi 0, %s135
    %s137 = sphi 0, %s135
    %s138 = sphi 0, %s137
    %s152 = sphi 0, %s138
    %s156 = sphi 0, %s156
    %s158 = sphi 0, %s156
    %s159 = sphi 0, %s158
    %s173 = sphi 0, %s159
    %s177 = sphi 0, %s177
    %s179 = sphi 0, %s177
    %s180 = sphi 0, %s179
    %s194 = sphi 0, %s180
    %s198 = sphi 0, %s198
    %s200 = sphi 0, %s198
    %s201 = sphi 0, %s200
    %s215 = sphi 0, %s201
    %s221 = sphi 0, %s223
    %s224 = sphi 0, %s221
    %s225 = sphi 0, %s224
    %s241 = sphi 0, %s225
  $region4: #{feedforward_nn.1} parent=0 // loop_header_branch
    %20 = sbr.rel (%p18) target = $region8
  $region5: #{feedforward_nn.1} parent=0 // loop_body
    %s22 = ssub.s32 %s17, 1
    %s23 = ssub.s32 %s17, 2
    %s24 = sadd.s32 %s17, 1
    %s25 = ssub.s32 %s17, %s24
    %p26 = scmp.eq.s32.totalorder %s25, 0
    %s28 = sadd.s32 %s27, 1
    %s29 = scalar_select %p26, %s27, %s28
    %p32 = pneg %p26
    %p33 = scmp.eq.s32.totalorder %s17, 1
    %p34 = por %p32, %p33
    %p35 = scmp.ne.s32.totalorder %s27, %s30
    %p36 = scmp.eq.s32.totalorder %s17, 0
    %p37 = por %p35, %p36
    %p38 = scmp.ne.s32.totalorder %s27, %s30
    %p39 = scmp.eq.s32.totalorder %s22, 1
    %p40 = por %p38, %p39
    %p41 = scmp.ne.s32.totalorder %s30, %s31
    %p42 = scmp.eq.s32.totalorder %s22, 0
    %p43 = por %p41, %p42
    %p44 = scmp.ne.s32.totalorder %s30, %s31
    %p45 = scmp.eq.s32.totalorder %s23, 1
    %p46 = por %p44, %p45
    %p48 = scmp.ne.s32.totalorder %s31, %s47
    %p49 = scmp.eq.s32.totalorder %s23, 0
    %p50 = por %p48, %p49
    %s52 = sadd.s32 %s51, 1
    %p55 = scmp.eq.s32.totalorder %s17, 1
    %p56 = scmp.ne.s32.totalorder %s51, %s53
    %p57 = scmp.eq.s32.totalorder %s17, 0
    %p58 = por %p56, %p57
    %p59 = scmp.ne.s32.totalorder %s51, %s53
    %p60 = scmp.eq.s32.totalorder %s22, 1
    %p61 = por %p59, %p60
    %p62 = scmp.ne.s32.totalorder %s53, %s54
    %p63 = scmp.eq.s32.totalorder %s22, 0
    %p64 = por %p62, %p63
    %p65 = scmp.ne.s32.totalorder %s53, %s54
    %p66 = scmp.eq.s32.totalorder %s23, 1
    %p67 = por %p65, %p66
    %p69 = scmp.ne.s32.totalorder %s54, %s68
    %p70 = scmp.eq.s32.totalorder %s23, 0
    %p71 = por %p69, %p70
    %s73 = sadd.s32 %s72, 1
    %p76 = scmp.eq.s32.totalorder %s17, 1
    %p77 = scmp.ne.s32.totalorder %s72, %s74
    %p78 = scmp.eq.s32.totalorder %s17, 0
    %p79 = por %p77, %p78
    %p80 = scmp.ne.s32.totalorder %s72, %s74
    %p81 = scmp.eq.s32.totalorder %s22, 1
    %p82 = por %p80, %p81
    %p83 = scmp.ne.s32.totalorder %s74, %s75
    %p84 = scmp.eq.s32.totalorder %s22, 0
    %p85 = por %p83, %p84
    %p86 = scmp.ne.s32.totalorder %s74, %s75
    %p87 = scmp.eq.s32.totalorder %s23, 1
    %p88 = por %p86, %p87
    %p90 = scmp.ne.s32.totalorder %s75, %s89
    %p91 = scmp.eq.s32.totalorder %s23, 0
    %p92 = por %p90, %p91
    %s94 = sadd.s32 %s93, 1
    %p97 = scmp.eq.s32.totalorder %s17, 1
    %p98 = scmp.ne.s32.totalorder %s93, %s95
    %p99 = scmp.eq.s32.totalorder %s17, 0
    %p100 = por %p98, %p99
    %p101 = scmp.ne.s32.totalorder %s93, %s95
    %p102 = scmp.eq.s32.totalorder %s22, 1
    %p103 = por %p101, %p102
    %p104 = scmp.ne.s32.totalorder %s95, %s96
    %p105 = scmp.eq.s32.totalorder %s22, 0
    %p106 = por %p104, %p105
    %p107 = scmp.ne.s32.totalorder %s95, %s96
    %p108 = scmp.eq.s32.totalorder %s23, 1
    %p109 = por %p107, %p108
    %p111 = scmp.ne.s32.totalorder %s96, %s110
    %p112 = scmp.eq.s32.totalorder %s23, 0
    %p113 = por %p111, %p112
    %s115 = sadd.s32 %s114, 1
    %p118 = scmp.eq.s32.totalorder %s17, 1
    %p119 = scmp.ne.s32.totalorder %s114, %s116
    %p120 = scmp.eq.s32.totalorder %s17, 0
    %p121 = por %p119, %p120
    %p122 = scmp.ne.s32.totalorder %s114, %s116
    %p123 = scmp.eq.s32.totalorder %s22, 1
    %p124 = por %p122, %p123
    %p125 = scmp.ne.s32.totalorder %s116, %s117
    %p126 = scmp.eq.s32.totalorder %s22, 0
    %p127 = por %p125, %p126
    %p128 = scmp.ne.s32.totalorder %s116, %s117
    %p129 = scmp.eq.s32.totalorder %s23, 1
    %p130 = por %p128, %p129
    %p132 = scmp.ne.s32.totalorder %s117, %s131
    %p133 = scmp.eq.s32.totalorder %s23, 0
    %p134 = por %p132, %p133
    %s136 = sadd.s32 %s135, 1
    %p139 = scmp.eq.s32.totalorder %s17, 1
    %p140 = scmp.ne.s32.totalorder %s135, %s137
    %p141 = scmp.eq.s32.totalorder %s17, 0
    %p142 = por %p140, %p141
    %p143 = scmp.ne.s32.totalorder %s135, %s137
    %p144 = scmp.eq.s32.totalorder %s22, 1
    %p145 = por %p143, %p144
    %p146 = scmp.ne.s32.totalorder %s137, %s138
    %p147 = scmp.eq.s32.totalorder %s22, 0
    %p148 = por %p146, %p147
    %p149 = scmp.ne.s32.totalorder %s137, %s138
    %p150 = scmp.eq.s32.totalorder %s23, 1
    %p151 = por %p149, %p150
    %p153 = scmp.ne.s32.totalorder %s138, %s152
    %p154 = scmp.eq.s32.totalorder %s23, 0
    %p155 = por %p153, %p154
    %s157 = sadd.s32 %s156, 1
    %p160 = scmp.eq.s32.totalorder %s17, 1
    %p161 = scmp.ne.s32.totalorder %s156, %s158
    %p162 = scmp.eq.s32.totalorder %s17, 0
    %p163 = por %p161, %p162
    %p164 = scmp.ne.s32.totalorder %s156, %s158
    %p165 = scmp.eq.s32.totalorder %s22, 1
    %p166 = por %p164, %p165
    %p167 = scmp.ne.s32.totalorder %s158, %s159
    %p168 = scmp.eq.s32.totalorder %s22, 0
    %p169 = por %p167, %p168
    %p170 = scmp.ne.s32.totalorder %s158, %s159
    %p171 = scmp.eq.s32.totalorder %s23, 1
    %p172 = por %p170, %p171
    %p174 = scmp.ne.s32.totalorder %s159, %s173
    %p175 = scmp.eq.s32.totalorder %s23, 0
    %p176 = por %p174, %p175
    %s178 = sadd.s32 %s177, 1
    %p181 = scmp.eq.s32.totalorder %s17, 1
    %p182 = scmp.ne.s32.totalorder %s177, %s179
    %p183 = scmp.eq.s32.totalorder %s17, 0
    %p184 = por %p182, %p183
    %p185 = scmp.ne.s32.totalorder %s177, %s179
    %p186 = scmp.eq.s32.totalorder %s22, 1
    %p187 = por %p185, %p186
    %p188 = scmp.ne.s32.totalorder %s179, %s180
    %p189 = scmp.eq.s32.totalorder %s22, 0
    %p190 = por %p188, %p189
    %p191 = scmp.ne.s32.totalorder %s179, %s180
    %p192 = scmp.eq.s32.totalorder %s23, 1
    %p193 = por %p191, %p192
    %p195 = scmp.ne.s32.totalorder %s180, %s194
    %p196 = scmp.eq.s32.totalorder %s23, 0
    %p197 = por %p195, %p196
    %s199 = sadd.s32 %s198, 1
    %p202 = scmp.eq.s32.totalorder %s17, 1
    %p203 = scmp.ne.s32.totalorder %s198, %s200
    %p204 = scmp.eq.s32.totalorder %s17, 0
    %p205 = por %p203, %p204
    %p206 = scmp.ne.s32.totalorder %s198, %s200
    %p207 = scmp.eq.s32.totalorder %s22, 1
    %p208 = por %p206, %p207
    %p209 = scmp.ne.s32.totalorder %s200, %s201
    %p210 = scmp.eq.s32.totalorder %s22, 0
    %p211 = por %p209, %p210
    %p212 = scmp.ne.s32.totalorder %s200, %s201
    %p213 = scmp.eq.s32.totalorder %s23, 1
    %p214 = por %p212, %p213
    %p216 = scmp.ne.s32.totalorder %s201, %s215
    %p217 = scmp.eq.s32.totalorder %s23, 0
    %p218 = por %p216, %p217
    %s219 = ssub.s32 %s17, %s24
    %p220 = scmp.eq.s32.totalorder %s219, 0
    %s222 = sadd.s32 %s221, 1
    %s223 = scalar_select %p220, %s221, %s222
    %p226 = pneg %p220
    %p227 = scmp.eq.s32.totalorder %s17, 1
    %p228 = por %p226, %p227
    %p229 = scmp.ne.s32.totalorder %s221, %s224
    %p230 = scmp.eq.s32.totalorder %s17, 0
    %p231 = por %p229, %p230
    %p232 = scmp.ne.s32.totalorder %s221, %s224
    %p233 = scmp.eq.s32.totalorder %s22, 1
    %p234 = por %p232, %p233
    %p235 = scmp.ne.s32.totalorder %s224, %s225
    %p236 = scmp.eq.s32.totalorder %s22, 0
    %p237 = por %p235, %p236
    %p238 = scmp.ne.s32.totalorder %s224, %s225
    %p239 = scmp.eq.s32.totalorder %s23, 1
    %p240 = por %p238, %p239
    %p242 = scmp.ne.s32.totalorder %s225, %s241
    %p243 = scmp.eq.s32.totalorder %s23, 0
    %p244 = por %p242, %p243
    %p245 = scmp.le.s32.totalorder 1, %s17
    %p246 = scmp.lt.s32.totalorder %s17, 3
    %p247 = pnand %p245, %p246
    %p248 = pneg %p247
    // Predicated region
    $region9: #{feedforward_nn.1} parent=5 // pred_check
      _
    $region10: #{feedforward_nn.1} parent=5 // pred_check_branch
      %250 = sbr.rel (%p247) target = $region12
    $region11: #{feedforward_nn.1} parent=5 // pred_region
      %s251 = ssub.s32 %s17, 1
      // Predicated region
      $region13: #{feedforward_nn.1} parent=11 // pred_check
        %p252 = pneg %p64
      $region14: #{feedforward_nn.1} parent=11 // pred_check_branch
        %254 = sbr.rel (%p252) target = $region16
      $region15: #{feedforward_nn.1} parent=11 // pred_region
        _
      $region16: #{feedforward_nn.1} parent=11 // pred_fallthru
        _
      // Predicated region
      $region17: #{feedforward_nn.1} parent=11 // pred_check
        %p255 = pneg %p85
      $region18: #{feedforward_nn.1} parent=11 // pred_check_branch
        %257 = sbr.rel (%p255) target = $region20
      $region19: #{feedforward_nn.1} parent=11 // pred_region
        _
      $region20: #{feedforward_nn.1} parent=11 // pred_fallthru
        _
      // Predicated region
      $region21: #{feedforward_nn.1} parent=11 // pred_check
        %p258 = pneg %p106
      $region22: #{feedforward_nn.1} parent=11 // pred_check_branch
        %260 = sbr.rel (%p258) target = $region24
      $region23: #{feedforward_nn.1} parent=11 // pred_region
        _
      $region24: #{feedforward_nn.1} parent=11 // pred_fallthru
        _
      // Predicated region
      $region25: #{feedforward_nn.1} parent=11 // pred_check
        %p261 = pneg %p127
      $region26: #{feedforward_nn.1} parent=11 // pred_check_branch
        %263 = sbr.rel (%p261) target = $region28
      $region27: #{feedforward_nn.1} parent=11 // pred_region
        _
      $region28: #{feedforward_nn.1} parent=11 // pred_fallthru
        _
      // Predicated region
      $region29: #{feedforward_nn.1} parent=11 // pred_check
        %p264 = pneg %p148
      $region30: #{feedforward_nn.1} parent=11 // pred_check_branch
        %266 = sbr.rel (%p264) target = $region32
      $region31: #{feedforward_nn.1} parent=11 // pred_region
        _
      $region32: #{feedforward_nn.1} parent=11 // pred_fallthru
        _
      // Predicated region
      $region33: #{feedforward_nn.1} parent=11 // pred_check
        %p267 = pneg %p169
      $region34: #{feedforward_nn.1} parent=11 // pred_check_branch
        %269 = sbr.rel (%p267) target = $region36
      $region35: #{feedforward_nn.1} parent=11 // pred_region
        _
      $region36: #{feedforward_nn.1} parent=11 // pred_fallthru
        _
      // Predicated region
      $region37: #{feedforward_nn.1} parent=11 // pred_check
        %p270 = pneg %p190
      $region38: #{feedforward_nn.1} parent=11 // pred_check_branch
        %272 = sbr.rel (%p270) target = $region40
      $region39: #{feedforward_nn.1} parent=11 // pred_region
        _
      $region40: #{feedforward_nn.1} parent=11 // pred_fallthru
        _
      // Predicated region
      $region41: #{feedforward_nn.1} parent=11 // pred_check
        %p273 = pneg %p211
      $region42: #{feedforward_nn.1} parent=11 // pred_check_branch
        %275 = sbr.rel (%p273) target = $region44
      $region43: #{feedforward_nn.1} parent=11 // pred_region
        _
      $region44: #{feedforward_nn.1} parent=11 // pred_fallthru
        _
    $region12: #{feedforward_nn.1} parent=5 // pred_fallthru
      _
    %p276 = scmp.lt.s32.totalorder %s17, 2
    // Predicated region
    $region45: #{feedforward_nn.1} parent=5 // pred_check
      %p277 = pneg %p276
    $region46: #{feedforward_nn.1} parent=5 // pred_check_branch
      %279 = sbr.rel (%p277) target = $region48
    $region47: #{feedforward_nn.1} parent=5 // pred_region
      // Predicated region
      $region49: #{feedforward_nn.1} parent=47 // pred_check
        %p280 = pneg %p37
      $region50: #{feedforward_nn.1} parent=47 // pred_check_branch
        %282 = sbr.rel (%p280) target = $region52
      $region51: #{feedforward_nn.1} parent=47 // pred_region
        %s283 = smul.u32 64, %s17
        %p284 = scmp.lt.s32.totalorder %s283, 127
        %s285 = scalar_select %p284, %s283, 127
        %s286 = smul.addr %s285, 8
        %s287 = scalar_lea.vmem %s0, %s286
        %s288 = smul.u32 64, %s17
      $region52: #{feedforward_nn.1} parent=47 // pred_fallthru
        _
    $region48: #{feedforward_nn.1} parent=5 // pred_fallthru
      _
    %p289 = scmp.le.s32.totalorder 1, %s17
    %p290 = scmp.lt.s32.totalorder %s17, 3
    %p291 = pnand %p289, %p290
    %p292 = pneg %p291
    // Predicated region
    $region53: #{feedforward_nn.1} parent=5 // pred_check
      _
    $region54: #{feedforward_nn.1} parent=5 // pred_check_branch
      %294 = sbr.rel (%p291) target = $region56
    $region55: #{feedforward_nn.1} parent=5 // pred_region
      %s295 = ssub.s32 %s17, 1
      %s296 = smul.u32 64, %s22
      %p297 = scmp.lt.s32.totalorder %s296, 127
      %s298 = scalar_select %p297, %s296, 127
      %s299 = smul.addr %s298, 8
      %s300 = scalar_lea.vmem %s0, %s299
      %p301 = pneg %p43
      %p302 = pneg %p40
      %p303 = pneg %p64
      %p304 = pneg %p61
      %p305 = pneg %p85
      %p306 = pneg %p82
      %p307 = pneg %p106
      %p308 = pneg %p103
      %p309 = pneg %p127
      %p310 = pneg %p124
      %p311 = pneg %p148
      %p312 = pneg %p145
      %p313 = pneg %p169
      %p314 = pneg %p166
      %p315 = pneg %p190
      %p316 = pneg %p187
      %p317 = pneg %p211
      %p318 = pneg %p208
      %p319 = pneg %p237
      %p320 = pneg %p234
      %s321 = smul.u32 4, %s22
      %p322 = scmp.lt.s32.totalorder %s321, 7
      %s323 = scalar_select %p322, %s321, 7
      %s324 = scalar_lea.vmem %s9, %s323
      %s325 = smul.u32 64, %s22
      %p326 = scmp.lt.s32.totalorder %s325, 127
      %s327 = scalar_select %p326, %s325, 127
      %s328 = smul.addr %s327, 8
      %s329 = scalar_lea.vmem %s0, %s328
      %s330 = smul.u32 64, %s22
      %s331 = smul.u32 4, %s22
      %p332 = scmp.lt.s32.totalorder %s331, 7
      %s333 = scalar_select %p332, %s331, 7
      %s334 = scalar_lea.vmem %s9, %s333
      %s335 = smul.u32 4, %s22
      %v337 = vld [vmem:[%s329] sm:$0xff]
      %v338 = vld [vmem:[%s329 + $0x8] sm:$0xff]
      %v339 = vld [vmem:[%s329 + $0x10] sm:$0xff]
      %v340 = vld [vmem:[%s329 + $0x18] sm:$0xff]
      %v341 = vld [vmem:[%s329 + $0x20] sm:$0xff]
      %v342 = vld [vmem:[%s329 + $0x28] sm:$0xff]
      %v343 = vld [vmem:[%s329 + $0x30] sm:$0xff]
      %v344 = vld [vmem:[%s329 + $0x38] sm:$0xff]
      %v345 = vld [vmem:[%s329 + $0x40] sm:$0xff]
      %v346 = vld [vmem:[%s329 + $0x48] sm:$0xff]
      %v347 = vld [vmem:[%s329 + $0x50] sm:$0xff]
      %v348 = vld [vmem:[%s329 + $0x58] sm:$0xff]
      %v349 = vld [vmem:[%s329 + $0x60] sm:$0xff]
      %v350 = vld [vmem:[%s329 + $0x68] sm:$0xff]
      %v351 = vld [vmem:[%s329 + $0x70] sm:$0xff]
      %v352 = vld [vmem:[%s329 + $0x78] sm:$0xff]
      %v353 = vld [vmem:[%s329 + $0x80] sm:$0xff]
      %v354 = vld [vmem:[%s329 + $0x88] sm:$0xff]
      %v355 = vld [vmem:[%s329 + $0x90] sm:$0xff]
      %v356 = vld [vmem:[%s329 + $0x98] sm:$0xff]
      %v357 = vld [vmem:[%s329 + $0xa0] sm:$0xff]
      %v358 = vld [vmem:[%s329 + $0xa8] sm:$0xff]
      %v359 = vld [vmem:[%s329 + $0xb0] sm:$0xff]
      %v360 = vld [vmem:[%s329 + $0xb8] sm:$0xff]
      %v361 = vld [vmem:[%s329 + $0xc0] sm:$0xff]
      %v362 = vld [vmem:[%s329 + $0xc8] sm:$0xff]
      %v363 = vld [vmem:[%s329 + $0xd0] sm:$0xff]
      %v364 = vld [vmem:[%s329 + $0xd8] sm:$0xff]
      %v365 = vld [vmem:[%s329 + $0xe0] sm:$0xff]
      %v366 = vld [vmem:[%s329 + $0xe8] sm:$0xff]
      %v367 = vld [vmem:[%s329 + $0xf0] sm:$0xff]
      %v368 = vld [vmem:[%s329 + $0xf8] sm:$0xff]
      %v369 = vld [vmem:[%s329 + $0x100] sm:$0xff]
      %v370 = vld [vmem:[%s329 + $0x108] sm:$0xff]
      %v371 = vld [vmem:[%s329 + $0x110] sm:$0xff]
      %v372 = vld [vmem:[%s329 + $0x118] sm:$0xff]
      %v373 = vld [vmem:[%s329 + $0x120] sm:$0xff]
      %v374 = vld [vmem:[%s329 + $0x128] sm:$0xff]
      %v375 = vld [vmem:[%s329 + $0x130] sm:$0xff]
      %v376 = vld [vmem:[%s329 + $0x138] sm:$0xff]
      %v377 = vld [vmem:[%s329 + $0x140] sm:$0xff]
      %v378 = vld [vmem:[%s329 + $0x148] sm:$0xff]
      %v379 = vld [vmem:[%s329 + $0x150] sm:$0xff]
      %v380 = vld [vmem:[%s329 + $0x158] sm:$0xff]
      %v381 = vld [vmem:[%s329 + $0x160] sm:$0xff]
      %v382 = vld [vmem:[%s329 + $0x168] sm:$0xff]
      %v383 = vld [vmem:[%s329 + $0x170] sm:$0xff]
      %v384 = vld [vmem:[%s329 + $0x178] sm:$0xff]
      %v385 = vld [vmem:[%s329 + $0x180] sm:$0xff]
      %v386 = vld [vmem:[%s329 + $0x188] sm:$0xff]
      %v387 = vld [vmem:[%s329 + $0x190] sm:$0xff]
      %v388 = vld [vmem:[%s329 + $0x198] sm:$0xff]
      %v389 = vld [vmem:[%s329 + $0x1a0] sm:$0xff]
      %v390 = vld [vmem:[%s329 + $0x1a8] sm:$0xff]
      %v391 = vld [vmem:[%s329 + $0x1b0] sm:$0xff]
      %v392 = vld [vmem:[%s329 + $0x1b8] sm:$0xff]
      %v393 = vld [vmem:[%s329 + $0x1c0] sm:$0xff]
      %v394 = vld [vmem:[%s329 + $0x1c8] sm:$0xff]
      %v395 = vld [vmem:[%s329 + $0x1d0] sm:$0xff]
      %v396 = vld [vmem:[%s329 + $0x1d8] sm:$0xff]
      %v397 = vld [vmem:[%s329 + $0x1e0] sm:$0xff]
      %v398 = vld [vmem:[%s329 + $0x1e8] sm:$0xff]
      %v399 = vld [vmem:[%s329 + $0x1f0] sm:$0xff]
      %v400 = vld [vmem:[%s329 + $0x1f8] sm:$0xff]
      %v401 = vpack.c.bf16 %v338, %v337
      %v402 = vpack.c.bf16 %v340, %v339
      %v403 = vpack.c.bf16 %v342, %v341
      %v404 = vpack.c.bf16 %v344, %v343
      %v405 = vpack.c.bf16 %v346, %v345
      %v406 = vpack.c.bf16 %v348, %v347
      %v407 = vpack.c.bf16 %v350, %v349
      %v408 = vpack.c.bf16 %v352, %v351
      %v409 = vpack.c.bf16 %v354, %v353
      %v410 = vpack.c.bf16 %v356, %v355
      %v411 = vpack.c.bf16 %v358, %v357
      %v412 = vpack.c.bf16 %v360, %v359
      %v413 = vpack.c.bf16 %v362, %v361
      %v414 = vpack.c.bf16 %v364, %v363
      %v415 = vpack.c.bf16 %v366, %v365
      %v416 = vpack.c.bf16 %v368, %v367
      %v417 = vpack.c.bf16 %v370, %v369
      %v418 = vpack.c.bf16 %v372, %v371
      %v419 = vpack.c.bf16 %v374, %v373
      %v420 = vpack.c.bf16 %v376, %v375
      %v421 = vpack.c.bf16 %v378, %v377
      %v422 = vpack.c.bf16 %v380, %v379
      %v423 = vpack.c.bf16 %v382, %v381
      %v424 = vpack.c.bf16 %v384, %v383
      %v425 = vpack.c.bf16 %v386, %v385
      %v426 = vpack.c.bf16 %v388, %v387
      %v427 = vpack.c.bf16 %v390, %v389
      %v428 = vpack.c.bf16 %v392, %v391
      %v429 = vpack.c.bf16 %v394, %v393
      %v430 = vpack.c.bf16 %v396, %v395
      %v431 = vpack.c.bf16 %v398, %v397
      %v432 = vpack.c.bf16 %v400, %v399
      %v433 = vld [vmem:[%s1] sm:$0xf]
      %v434 = vld [vmem:[%s1 + $0x4] sm:$0xf]
      %v435 = vld [vmem:[%s1 + $0x8] sm:$0xf]
      %v436 = vld [vmem:[%s1 + $0xc] sm:$0xf]
      %v437 = vld [vmem:[%s1 + $0x10] sm:$0xf]
      %v438 = vld [vmem:[%s1 + $0x14] sm:$0x7]
      %v439 = vld [vmem:[%s2] sm:$0xff]
      %v440 = vld [vmem:[%s2 + $0x8] sm:$0xff]
      %v441 = vld [vmem:[%s2 + $0x10] sm:$0xff]
      %v442 = vld [vmem:[%s2 + $0x18] sm:$0xff]
      %v443 = vld [vmem:[%s2 + $0x20] sm:$0xff]
      %v444 = vld [vmem:[%s2 + $0x28] sm:$0x1f]
      %446 = vset.pattern.permute.xlu0 0
      %447 = vperm.xlu0 %446, %v439
      %v448 = vpop.permute.xlu0 %447
      %451 = vset.pattern.permute.xlu0 0
      %452 = vperm.xlu0 %451, %v440
      %v453 = vpop.permute.xlu0 %452
      %456 = vset.pattern.permute.xlu0 0
      %457 = vperm.xlu0 %456, %v441
      %v458 = vpop.permute.xlu0 %457
      %461 = vset.pattern.permute.xlu0 0
      %462 = vperm.xlu0 %461, %v442
      %v463 = vpop.permute.xlu0 %462
      %466 = vset.pattern.permute.xlu0 0
      %467 = vperm.xlu0 %466, %v443
      %v468 = vpop.permute.xlu0 %467
      %471 = vset.pattern.permute.xlu0 0
      %472 = vperm.xlu0 %471, %v444
      %v473 = vpop.permute.xlu0 %472
      %v481 = vunpack.c.l.b16 %v433
      %v482 = vunpack.c.l.b16 %v434
      %v483 = vunpack.c.l.b16 %v435
      %v484 = vunpack.c.l.b16 %v436
      %v485 = vunpack.c.l.b16 %v437
      %v486 = vunpack.c.l.b16 %v438
      %v487 = vpack.c.b16 %v482, %v481
      %v488 = vpack.c.b16 %v484, %v483
      %v489 = vpack.c.b16 %v486, %v485
      %vm490 = vcmask 80896
      %v492 = vsel %vm490, %v487, 0
      %v495 = vsel %vm490, %v488, 0
      %v498 = vsel %vm490, %v489, 0
      %v501 = vsel %vm490, %v401, 0
      %v504 = vsel %vm490, %v402, 0
      %v507 = vsel %vm490, %v403, 0
      %v510 = vsel %vm490, %v404, 0
      %v513 = vsel %vm490, %v405, 0
      %v516 = vsel %vm490, %v406, 0
      %v519 = vsel %vm490, %v407, 0
      %v522 = vsel %vm490, %v408, 0
      %v525 = vsel %vm490, %v409, 0
      %v528 = vsel %vm490, %v410, 0
      %v531 = vsel %vm490, %v411, 0
      %v534 = vsel %vm490, %v412, 0
      %v537 = vsel %vm490, %v413, 0
      %v540 = vsel %vm490, %v414, 0
      %v543 = vsel %vm490, %v415, 0
      %v546 = vsel %vm490, %v416, 0
      %v549 = vsel %vm490, %v417, 0
      %v552 = vsel %vm490, %v418, 0
      %v555 = vsel %vm490, %v419, 0
      %v558 = vsel %vm490, %v420, 0
      %v561 = vsel %vm490, %v421, 0
      %v564 = vsel %vm490, %v422, 0
      %v567 = vsel %vm490, %v423, 0
      %v570 = vsel %vm490, %v424, 0
      %v573 = vsel %vm490, %v425, 0
      %v576 = vsel %vm490, %v426, 0
      %v579 = vsel %vm490, %v427, 0
      %v582 = vsel %vm490, %v428, 0
      %v585 = vsel %vm490, %v429, 0
      %v588 = vsel %vm490, %v430, 0
      %v591 = vsel %vm490, %v431, 0
      %v594 = vsel %vm490, %v432, 0
      %596 = vmatprep.subr.bf16.mxu0 0
      %597 = vmatpush1.bf16.xpose.msra.mxu0 %v501
      %598 = vmatprep.subr.bf16.mxu0 0
      %599 = vmatpush1.bf16.xpose.msra.mxu0 %v504
      %600 = vmatprep.subr.bf16.mxu0 0
      %601 = vmatpush1.bf16.xpose.msra.mxu0 %v507
      %602 = vmatprep.subr.bf16.mxu0 0
      %603 = vmatpush1.bf16.xpose.msra.mxu0 %v510
      %604 = vmatprep.subr.bf16.mxu0 0
      %605 = vmatpush1.bf16.xpose.msra.mxu0 %v513
      %606 = vmatprep.subr.bf16.mxu0 0
      %607 = vmatpush1.bf16.xpose.msra.mxu0 %v516
      %608 = vmatprep.subr.bf16.mxu0 0
      %609 = vmatpush1.bf16.xpose.msra.mxu0 %v519
      %610 = vmatprep.subr.bf16.mxu0 0
      %611 = vmatpush1.bf16.xpose.msra.mxu0 %v522
      %612 = vmatprep.subr.bf16.mxu0 0
      %613 = vmatpush1.bf16.xpose.msra.mxu0 %v525
      %614 = vmatprep.subr.bf16.mxu0 0
      %615 = vmatpush1.bf16.xpose.msra.mxu0 %v528
      %616 = vmatprep.subr.bf16.mxu0 0
      %617 = vmatpush1.bf16.xpose.msra.mxu0 %v531
      %618 = vmatprep.subr.bf16.mxu0 0
      %619 = vmatpush1.bf16.xpose.msra.mxu0 %v534
      %620 = vmatprep.subr.bf16.mxu0 0
      %621 = vmatpush1.bf16.xpose.msra.mxu0 %v537
      %622 = vmatprep.subr.bf16.mxu0 0
      %623 = vmatpush1.bf16.xpose.msra.mxu0 %v540
      %624 = vmatprep.subr.bf16.mxu0 0
      %625 = vmatpush1.bf16.xpose.msra.mxu0 %v543
      %626 = vmatprep.subr.bf16.mxu0 0
      %627 = vmatpush1.bf16.xpose.msra.mxu0 %v546
      %628 = vmatprep.mubr.bf16.mxu0 0
      %629 = vmatmul.mubr.bf16.gmra.mrb[0].mxu0 %v492
      %v630 = vpop.f32.mrb[0].mxu0
      %v631 = vadd.f32 %v448, %v630
      %v632 = vpop.f32.mrb[0].mxu0
      %v633 = vadd.f32 %v448, %v632
      %v634 = vpop.f32.mrb[0].mxu0
      %v635 = vadd.f32 %v453, %v634
      %v636 = vpop.f32.mrb[0].mxu0
      %v637 = vadd.f32 %v453, %v636
      %638 = vmatprep.mubr.bf16.mxu0 0
      %639 = vmatmul.mubr.bf16.gmra.mrb[0].mxu0 %v495
      %v640 = vpop.f32.mrb[0].mxu0
      %v641 = vadd.f32 %v458, %v640
      %v642 = vpop.f32.mrb[0].mxu0
      %v643 = vadd.f32 %v458, %v642
      %v644 = vpop.f32.mrb[0].mxu0
      %v645 = vadd.f32 %v463, %v644
      %v646 = vpop.f32.mrb[0].mxu0
      %v647 = vadd.f32 %v463, %v646
      %648 = vmatprep.mubr.bf16.mxu0 0
      %649 = vmatmul.mubr.bf16.gmra.mrb[0].mxu0 %v498
      %v650 = vpop.f32.mrb[0].mxu0
      %v651 = vadd.f32 %v468, %v650
      %v652 = vpop.f32.mrb[0].mxu0
      %v653 = vadd.f32 %v468, %v652
      %v654 = vpop.f32.mrb[0].mxu0
      %v655 = vadd.f32 %v473, %v654
      %v656 = vpop.f32.mrb[0].mxu0
      %v657 = vadd.f32 %v473, %v656
      %658 = vdwg.mxu0
      %659 = vmatprep.subr.bf16.mxu0 0
      %660 = vmatpush1.bf16.xpose.msra.mxu0 %v549
      %661 = vmatprep.subr.bf16.mxu0 0
      %662 = vmatpush1.bf16.xpose.msra.mxu0 %v552
      %663 = vmatprep.subr.bf16.mxu0 0
      %664 = vmatpush1.bf16.xpose.msra.mxu0 %v555
      %665 = vmatprep.subr.bf16.mxu0 0
      %666 = vmatpush1.bf16.xpose.msra.mxu0 %v558
      %667 = vmatprep.subr.bf16.mxu0 0
      %668 = vmatpush1.bf16.xpose.msra.mxu0 %v561
      %669 = vmatprep.subr.bf16.mxu0 0
      %670 = vmatpush1.bf16.xpose.msra.mxu0 %v564
      %671 = vmatprep.subr.bf16.mxu0 0
      %672 = vmatpush1.bf16.xpose.msra.mxu0 %v567
      %673 = vmatprep.subr.bf16.mxu0 0
      %674 = vmatpush1.bf16.xpose.msra.mxu0 %v570
      %675 = vmatprep.subr.bf16.mxu0 0
      %676 = vmatpush1.bf16.xpose.msra.mxu0 %v573
      %677 = vmatprep.subr.bf16.mxu0 0
      %678 = vmatpush1.bf16.xpose.msra.mxu0 %v576
      %679 = vmatprep.subr.bf16.mxu0 0
      %680 = vmatpush1.bf16.xpose.msra.mxu0 %v579
      %681 = vmatprep.subr.bf16.mxu0 0
      %682 = vmatpush1.bf16.xpose.msra.mxu0 %v582
      %683 = vmatprep.subr.bf16.mxu0 0
      %684 = vmatpush1.bf16.xpose.msra.mxu0 %v585
      %685 = vmatprep.subr.bf16.mxu0 0
      %686 = vmatpush1.bf16.xpose.msra.mxu0 %v588
      %687 = vmatprep.subr.bf16.mxu0 0
      %688 = vmatpush1.bf16.xpose.msra.mxu0 %v591
      %689 = vmatprep.subr.bf16.mxu0 0
      %690 = vmatpush1.bf16.xpose.msra.mxu0 %v594
      %691 = vmatprep.mubr.bf16.mxu0 0
      %692 = vmatmul.mubr.bf16.gmra.mrb[0].mxu0 %v492
      %v693 = vpop.f32.mrb[0].mxu0
      %v694 = vadd.f32 %v448, %v693
      %v695 = vpop.f32.mrb[0].mxu0
      %v696 = vadd.f32 %v448, %v695
      %v697 = vpop.f32.mrb[0].mxu0
      %v698 = vadd.f32 %v453, %v697
      %v699 = vpop.f32.mrb[0].mxu0
      %v700 = vadd.f32 %v453, %v699
      %701 = vmatprep.mubr.bf16.mxu0 0
      %702 = vmatmul.mubr.bf16.gmra.mrb[0].mxu0 %v495
      %v703 = vpop.f32.mrb[0].mxu0
      %v704 = vadd.f32 %v458, %v703
      %v705 = vpop.f32.mrb[0].mxu0
      %v706 = vadd.f32 %v458, %v705
      %v707 = vpop.f32.mrb[0].mxu0
      %v708 = vadd.f32 %v463, %v707
      %v709 = vpop.f32.mrb[0].mxu0
      %v710 = vadd.f32 %v463, %v709
      %711 = vmatprep.mubr.bf16.mxu0 0
      %712 = vmatmul.mubr.bf16.gmra.mrb[0].mxu0 %v498
      %v713 = vpop.f32.mrb[0].mxu0
      %v714 = vadd.f32 %v468, %v713
      %v715 = vpop.f32.mrb[0].mxu0
      %v716 = vadd.f32 %v468, %v715
      %v717 = vpop.f32.mrb[0].mxu0
      %v718 = vadd.f32 %v473, %v717
      %v719 = vpop.f32.mrb[0].mxu0
      %v720 = vadd.f32 %v473, %v719
      %721 = vdwg.mxu0
      %v722 = vmax.f32 %v631, 0.0
      %v723 = vmax.f32 %v633, 0.0
      %v724 = vmax.f32 %v694, 0.0
      %v725 = vmax.f32 %v696, 0.0
      %v726 = vmax.f32 %v635, 0.0
      %v727 = vmax.f32 %v637, 0.0
      %v728 = vmax.f32 %v698, 0.0
      %v729 = vmax.f32 %v700, 0.0
      %v730 = vmax.f32 %v641, 0.0
      %v731 = vmax.f32 %v643, 0.0
      %v732 = vmax.f32 %v704, 0.0
      %v733 = vmax.f32 %v706, 0.0
      %v734 = vmax.f32 %v645, 0.0
      %v735 = vmax.f32 %v647, 0.0
      %v736 = vmax.f32 %v708, 0.0
      %v737 = vmax.f32 %v710, 0.0
      %v738 = vmax.f32 %v651, 0.0
      %v739 = vmax.f32 %v653, 0.0
      %v740 = vmax.f32 %v714, 0.0
      %v741 = vmax.f32 %v716, 0.0
      %v742 = vmax.f32 %v655, 0.0
      %v743 = vmax.f32 %v657, 0.0
      %v744 = vmax.f32 %v718, 0.0
      %v745 = vmax.f32 %v720, 0.0
      %v746 = vld [vmem:[%s3] sm:$0xf]
      %v747 = vld [vmem:[%s3 + $0x4] sm:$0xf]
      %v748 = vld [vmem:[%s3 + $0x8] sm:$0xf]
      %v749 = vpack.c.bf16 %v726, %v722
      %v750 = vpack.c.bf16 %v727, %v723
      %v751 = vpack.c.bf16 %v728, %v724
      %v752 = vpack.c.bf16 %v729, %v725
      %v753 = vpack.c.bf16 %v734, %v730
      %v754 = vpack.c.bf16 %v735, %v731
      %v755 = vpack.c.bf16 %v736, %v732
      %v756 = vpack.c.bf16 %v737, %v733
      %v757 = vpack.c.bf16 %v742, %v738
      %v758 = vpack.c.bf16 %v743, %v739
      %v759 = vpack.c.bf16 %v744, %v740
      %v760 = vpack.c.bf16 %v745, %v741
      %v761 = vld [vmem:[%s4] sm:$0xff]
      %v762 = vld [vmem:[%s4 + $0x8] sm:$0xff]
      %v763 = vld [vmem:[%s4 + $0x10] sm:$0x7f]
      %765 = vset.pattern.permute.xlu0 0
      %766 = vperm.xlu0 %765, %v761
      %v767 = vpop.permute.xlu0 %766
      %770 = vset.pattern.permute.xlu0 0
      %771 = vperm.xlu0 %770, %v762
      %v772 = vpop.permute.xlu0 %771
      %775 = vset.pattern.permute.xlu0 0
      %776 = vperm.xlu0 %775, %v763
      %v777 = vpop.permute.xlu0 %776
      %v782 = vunpack.c.l.b16 %v746
      %v783 = vunpack.c.l.b16 %v747
      %v784 = vunpack.c.l.b16 %v748
      %v785 = vpack.c.b16 %v783, %v782
      %v786 = vpack.c.b16 %v784, %v784
      %vm787 = vcmask 367616
      %v789 = vsel %vm787, %v785, 0
      %v792 = vsel %vm787, %v786, 0
      %vm794 = vcmask 1045504
      %vm795 = vcmask 1046528
      %v796 = vsel %vm794, 4294967295, 65535
      %v797 = vsel %vm795, %v796, 0
      %v799 = vand.u32 %v757, %v797
      %v802 = vand.u32 %v758, %v797
      %v805 = vand.u32 %v759, %v797
      %v808 = vand.u32 %v760, %v797
      %810 = vmatprep.subr.bf16.mxu0 %v750
      %811 = vmatpush1.bf16.msra.mxu0 %v749
      %812 = vmatprep.subr.bf16.mxu0 %v754
      %813 = vmatpush1.bf16.msra.mxu0 %v753
      %814 = vmatprep.subr.bf16.mxu0 %v802
      %815 = vmatpush1.bf16.msra.mxu0 %v799
      %816 = vmatprep.subr.bf16.mxu0 0
      %817 = vmatpush1.bf16.msra.mxu0 0
      %818 = vmatprep.subr.bf16.mxu0 0
      %819 = vmatpush1.bf16.msra.mxu0 0
      %820 = vmatprep.subr.bf16.mxu0 0
      %821 = vmatpush1.bf16.msra.mxu0 0
      %822 = vmatprep.subr.bf16.mxu0 0
      %823 = vmatpush1.bf16.msra.mxu0 0
      %824 = vmatprep.subr.bf16.mxu0 0
      %825 = vmatpush1.bf16.msra.mxu0 0
      %826 = vmatprep.subr.bf16.mxu0 0
      %827 = vmatpush1.bf16.msra.mxu0 0
      %828 = vmatprep.subr.bf16.mxu0 0
      %829 = vmatpush1.bf16.msra.mxu0 0
      %830 = vmatprep.subr.bf16.mxu0 0
      %831 = vmatpush1.bf16.msra.mxu0 0
      %832 = vmatprep.subr.bf16.mxu0 0
      %833 = vmatpush1.bf16.msra.mxu0 0
      %834 = vmatprep.subr.bf16.mxu0 0
      %835 = vmatpush1.bf16.msra.mxu0 0
      %836 = vmatprep.subr.bf16.mxu0 0
      %837 = vmatpush1.bf16.msra.mxu0 0
      %838 = vmatprep.subr.bf16.mxu0 0
      %839 = vmatpush1.bf16.msra.mxu0 0
      %840 = vmatprep.subr.bf16.mxu0 0
      %841 = vmatpush1.bf16.msra.mxu0 0
      %842 = vmatprep.mubr.bf16.mxu0 0
      %843 = vmatmul.mubr.bf16.gmra.mrb[0].mxu0 %v789
      %v844 = vpop.f32.mrb[0].mxu0
      %v845 = vadd.f32 %v767, %v844
      %v846 = vpop.f32.mrb[0].mxu0
      %v847 = vadd.f32 %v767, %v846
      %v848 = vpop.f32.mrb[0].mxu0
      %v849 = vadd.f32 %v772, %v848
      %v850 = vpop.f32.mrb[0].mxu0
      %v851 = vadd.f32 %v772, %v850
      %852 = vmatprep.mubr.bf16.mxu0 0
      %853 = vmatmul.mubr.bf16.gmra.mrb[0].mxu0 %v792
      %v854 = vpop.f32.mrb[0].mxu0
      %v855 = vadd.f32 %v777, %v854
      %v856 = vpop.f32.mrb[0].mxu0
      %v857 = vadd.f32 %v777, %v856
      %v858 = vpop.f32.mrb[0].mxu0
      %v859 = vpop.f32.mrb[0].mxu0
      %860 = vdwg.mxu0
      %861 = vmatprep.subr.bf16.mxu0 %v752
      %862 = vmatpush1.bf16.msra.mxu0 %v751
      %863 = vmatprep.subr.bf16.mxu0 %v756
      %864 = vmatpush1.bf16.msra.mxu0 %v755
      %865 = vmatprep.subr.bf16.mxu0 %v808
      %866 = vmatpush1.bf16.msra.mxu0 %v805
      %867 = vmatprep.subr.bf16.mxu0 0
      %868 = vmatpush1.bf16.msra.mxu0 0
      %869 = vmatprep.subr.bf16.mxu0 0
      %870 = vmatpush1.bf16.msra.mxu0 0
      %871 = vmatprep.subr.bf16.mxu0 0
      %872 = vmatpush1.bf16.msra.mxu0 0
      %873 = vmatprep.subr.bf16.mxu0 0
      %874 = vmatpush1.bf16.msra.mxu0 0
      %875 = vmatprep.subr.bf16.mxu0 0
      %876 = vmatpush1.bf16.msra.mxu0 0
      %877 = vmatprep.subr.bf16.mxu0 0
      %878 = vmatpush1.bf16.msra.mxu0 0
      %879 = vmatprep.subr.bf16.mxu0 0
      %880 = vmatpush1.bf16.msra.mxu0 0
      %881 = vmatprep.subr.bf16.mxu0 0
      %882 = vmatpush1.bf16.msra.mxu0 0
      %883 = vmatprep.subr.bf16.mxu0 0
      %884 = vmatpush1.bf16.msra.mxu0 0
      %885 = vmatprep.subr.bf16.mxu0 0
      %886 = vmatpush1.bf16.msra.mxu0 0
      %887 = vmatprep.subr.bf16.mxu0 0
      %888 = vmatpush1.bf16.msra.mxu0 0
      %889 = vmatprep.subr.bf16.mxu0 0
      %890 = vmatpush1.bf16.msra.mxu0 0
      %891 = vmatprep.subr.bf16.mxu0 0
      %892 = vmatpush1.bf16.msra.mxu0 0
      %893 = vmatprep.mubr.bf16.mxu0 0
      %894 = vmatmul.mubr.bf16.gmra.mrb[0].mxu0 %v789
      %v895 = vpop.f32.mrb[0].mxu0
      %v896 = vadd.f32 %v767, %v895
      %v897 = vpop.f32.mrb[0].mxu0
      %v898 = vadd.f32 %v767, %v897
      %v899 = vpop.f32.mrb[0].mxu0
      %v900 = vadd.f32 %v772, %v899
      %v901 = vpop.f32.mrb[0].mxu0
      %v902 = vadd.f32 %v772, %v901
      %903 = vmatprep.mubr.bf16.mxu0 0
      %904 = vmatmul.mubr.bf16.gmra.mrb[0].mxu0 %v792
      %v905 = vpop.f32.mrb[0].mxu0
      %v906 = vadd.f32 %v777, %v905
      %v907 = vpop.f32.mrb[0].mxu0
      %v908 = vadd.f32 %v777, %v907
      %v909 = vpop.f32.mrb[0].mxu0
      %v910 = vpop.f32.mrb[0].mxu0
      %911 = vdwg.mxu0
      %v912 = vmax.f32 %v845, 0.0
      %v913 = vmax.f32 %v847, 0.0
      %v914 = vmax.f32 %v896, 0.0
      %v915 = vmax.f32 %v898, 0.0
      %v916 = vmax.f32 %v849, 0.0
      %v917 = vmax.f32 %v851, 0.0
      %v918 = vmax.f32 %v900, 0.0
      %v919 = vmax.f32 %v902, 0.0
      %v920 = vmax.f32 %v855, 0.0
      %v921 = vmax.f32 %v857, 0.0
      %v922 = vmax.f32 %v906, 0.0
      %v923 = vmax.f32 %v908, 0.0
      %v924 = vld [vmem:[%s5] sm:$0xf]
      %v925 = vld [vmem:[%s5 + $0x4] sm:$0x3]
      %v926 = vpack.c.bf16 %v916, %v912
      %v927 = vpack.c.bf16 %v917, %v913
      %v928 = vpack.c.bf16 %v918, %v914
      %v929 = vpack.c.bf16 %v919, %v915
      %v930 = vpack.c.bf16 %v920, %v920
      %v931 = vpack.c.bf16 %v921, %v921
      %v932 = vpack.c.bf16 %v922, %v922
      %v933 = vpack.c.bf16 %v923, %v923
      %v934 = vld [vmem:[%s6] sm:$0xff]
      %v935 = vld [vmem:[%s6 + $0x8] sm:$0xf]
      %937 = vset.pattern.permute.xlu0 0
      %938 = vperm.xlu0 %937, %v934
      %v939 = vpop.permute.xlu0 %938
      %942 = vset.pattern.permute.xlu0 0
      %943 = vperm.xlu0 %942, %v935
      %v944 = vpop.permute.xlu0 %943
      %v948 = vunpack.c.l.b16 %v924
      %v949 = vunpack.c.l.b16 %v925
      %v950 = vpack.c.b16 %v949, %v948
      %vm951 = vcmask 187392
      %v953 = vsel %vm951, %v950, 0
      %vm955 = vcmask 1042432
      %vm956 = vcmask 1043456
      %v957 = vsel %vm955, 4294967295, 65535
      %v958 = vsel %vm956, %v957, 0
      %v960 = vand.u32 %v930, %v958
      %v963 = vand.u32 %v931, %v958
      %v966 = vand.u32 %v932, %v958
      %v969 = vand.u32 %v933, %v958
      %971 = vmatprep.subr.bf16.mxu0 %v927
      %972 = vmatpush1.bf16.msra.mxu0 %v926
      %973 = vmatprep.subr.bf16.mxu0 %v963
      %974 = vmatpush1.bf16.msra.mxu0 %v960
      %975 = vmatprep.subr.bf16.mxu0 0
      %976 = vmatpush1.bf16.msra.mxu0 0
      %977 = vmatprep.subr.bf16.mxu0 0
      %978 = vmatpush1.bf16.msra.mxu0 0
      %979 = vmatprep.subr.bf16.mxu0 0
      %980 = vmatpush1.bf16.msra.mxu0 0
      %981 = vmatprep.subr.bf16.mxu0 0
      %982 = vmatpush1.bf16.msra.mxu0 0
      %983 = vmatprep.subr.bf16.mxu0 0
      %984 = vmatpush1.bf16.msra.mxu0 0
      %985 = vmatprep.subr.bf16.mxu0 0
      %986 = vmatpush1.bf16.msra.mxu0 0
      %987 = vmatprep.subr.bf16.mxu0 0
      %988 = vmatpush1.bf16.msra.mxu0 0
      %989 = vmatprep.subr.bf16.mxu0 0
      %990 = vmatpush1.bf16.msra.mxu0 0
      %991 = vmatprep.subr.bf16.mxu0 0
      %992 = vmatpush1.bf16.msra.mxu0 0
      %993 = vmatprep.subr.bf16.mxu0 0
      %994 = vmatpush1.bf16.msra.mxu0 0
      %995 = vmatprep.subr.bf16.mxu0 0
      %996 = vmatpush1.bf16.msra.mxu0 0
      %997 = vmatprep.subr.bf16.mxu0 0
      %998 = vmatpush1.bf16.msra.mxu0 0
      %999 = vmatprep.subr.bf16.mxu0 0
      %1000 = vmatpush1.bf16.msra.mxu0 0
      %1001 = vmatprep.subr.bf16.mxu0 0
      %1002 = vmatpush1.bf16.msra.mxu0 0
      %1003 = vmatprep.mubr.bf16.mxu0 0
      %1004 = vmatmul.mubr.bf16.gmra.mrb[0].mxu0 %v953
      %v1005 = vpop.f32.mrb[0].mxu0
      %v1006 = vadd.f32 %v939, %v1005
      %v1007 = vpop.f32.mrb[0].mxu0
      %v1008 = vadd.f32 %v939, %v1007
      %v1009 = vpop.f32.mrb[0].mxu0
      %v1010 = vadd.f32 %v944, %v1009
      %v1011 = vpop.f32.mrb[0].mxu0
      %v1012 = vadd.f32 %v944, %v1011
      %1013 = vdwg.mxu0
      %1014 = vmatprep.subr.bf16.mxu0 %v929
      %1015 = vmatpush1.bf16.msra.mxu0 %v928
      %1016 = vmatprep.subr.bf16.mxu0 %v969
      %1017 = vmatpush1.bf16.msra.mxu0 %v966
      %1018 = vmatprep.subr.bf16.mxu0 0
      %1019 = vmatpush1.bf16.msra.mxu0 0
      %1020 = vmatprep.subr.bf16.mxu0 0
      %1021 = vmatpush1.bf16.msra.mxu0 0
      %1022 = vmatprep.subr.bf16.mxu0 0
      %1023 = vmatpush1.bf16.msra.mxu0 0
      %1024 = vmatprep.subr.bf16.mxu0 0
      %1025 = vmatpush1.bf16.msra.mxu0 0
      %1026 = vmatprep.subr.bf16.mxu0 0
      %1027 = vmatpush1.bf16.msra.mxu0 0
      %1028 = vmatprep.subr.bf16.mxu0 0
      %1029 = vmatpush1.bf16.msra.mxu0 0
      %1030 = vmatprep.subr.bf16.mxu0 0
      %1031 = vmatpush1.bf16.msra.mxu0 0
      %1032 = vmatprep.subr.bf16.mxu0 0
      %1033 = vmatpush1.bf16.msra.mxu0 0
      %1034 = vmatprep.subr.bf16.mxu0 0
      %1035 = vmatpush1.bf16.msra.mxu0 0
      %1036 = vmatprep.subr.bf16.mxu0 0
      %1037 = vmatpush1.bf16.msra.mxu0 0
      %1038 = vmatprep.subr.bf16.mxu0 0
      %1039 = vmatpush1.bf16.msra.mxu0 0
      %1040 = vmatprep.subr.bf16.mxu0 0
      %1041 = vmatpush1.bf16.msra.mxu0 0
      %1042 = vmatprep.subr.bf16.mxu0 0
      %1043 = vmatpush1.bf16.msra.mxu0 0
      %1044 = vmatprep.subr.bf16.mxu0 0
      %1045 = vmatpush1.bf16.msra.mxu0 0
      %1046 = vmatprep.mubr.bf16.mxu0 0
      %1047 = vmatmul.mubr.bf16.gmra.mrb[0].mxu0 %v953
      %v1048 = vpop.f32.mrb[0].mxu0
      %v1049 = vadd.f32 %v939, %v1048
      %v1050 = vpop.f32.mrb[0].mxu0
      %v1051 = vadd.f32 %v939, %v1050
      %v1052 = vpop.f32.mrb[0].mxu0
      %v1053 = vadd.f32 %v944, %v1052
      %v1054 = vpop.f32.mrb[0].mxu0
      %v1055 = vadd.f32 %v944, %v1054
      %1056 = vdwg.mxu0
      %v1057 = vmax.f32 %v1006, 0.0
      %v1058 = vmax.f32 %v1008, 0.0
      %v1059 = vmax.f32 %v1049, 0.0
      %v1060 = vmax.f32 %v1051, 0.0
      %v1061 = vmax.f32 %v1010, 0.0
      %v1062 = vmax.f32 %v1012, 0.0
      %v1063 = vmax.f32 %v1053, 0.0
      %v1064 = vmax.f32 %v1055, 0.0
      %v1065 = vld [vmem:[%s7] sm:$0x1]
      %v1066 = vpack.c.bf16 %v1061, %v1057
      %v1067 = vpack.c.bf16 %v1062, %v1058
      %v1068 = vpack.c.bf16 %v1063, %v1059
      %v1069 = vpack.c.bf16 %v1064, %v1060
      %v1070 = vld [vmem:[#allocation2] sm:$0x1]
      %1072 = vset.pattern.permute.xlu0 0
      %1073 = vperm.xlu0 %1072, %v1070
      %v1074 = vpop.permute.xlu0 %1073
      %v1076 = vlaneseq
      %v1077 = vshrl.u32 %v1076, 7
      %v1078 = vsub.s32 0, %v1077
      %v1079 = vrot.slane %v1074, %v1078
      %vm1080 = vcmask 97280
      %v1082 = vsel %vm1080, %v1065, 0
      %v1085 = vsel %vm794, %v1066, 0
      %v1088 = vsel %vm794, %v1067, 0
      %v1091 = vsel %vm794, %v1068, 0
      %v1094 = vsel %vm794, %v1069, 0
      %1096 = vmatprep.subr.bf16.mxu0 %v1088
      %1097 = vmatpush1.bf16.msra.mxu0 %v1085
      %1098 = vmatprep.subr.bf16.mxu0 0
      %1099 = vmatpush1.bf16.msra.mxu0 0
      %1100 = vmatprep.subr.bf16.mxu0 0
      %1101 = vmatpush1.bf16.msra.mxu0 0
      %1102 = vmatprep.subr.bf16.mxu0 0
      %1103 = vmatpush1.bf16.msra.mxu0 0
      %1104 = vmatprep.subr.bf16.mxu0 0
      %1105 = vmatpush1.bf16.msra.mxu0 0
      %1106 = vmatprep.subr.bf16.mxu0 0
      %1107 = vmatpush1.bf16.msra.mxu0 0
      %1108 = vmatprep.subr.bf16.mxu0 0
      %1109 = vmatpush1.bf16.msra.mxu0 0
      %1110 = vmatprep.subr.bf16.mxu0 0
      %1111 = vmatpush1.bf16.msra.mxu0 0
      %1112 = vmatprep.subr.bf16.mxu0 0
      %1113 = vmatpush1.bf16.msra.mxu0 0
      %1114 = vmatprep.subr.bf16.mxu0 0
      %1115 = vmatpush1.bf16.msra.mxu0 0
      %1116 = vmatprep.subr.bf16.mxu0 0
      %1117 = vmatpush1.bf16.msra.mxu0 0
      %1118 = vmatprep.subr.bf16.mxu0 0
      %1119 = vmatpush1.bf16.msra.mxu0 0
      %1120 = vmatprep.subr.bf16.mxu0 0
      %1121 = vmatpush1.bf16.msra.mxu0 0
      %1122 = vmatprep.subr.bf16.mxu0 0
      %1123 = vmatpush1.bf16.msra.mxu0 0
      %1124 = vmatprep.subr.bf16.mxu0 0
      %1125 = vmatpush1.bf16.msra.mxu0 0
      %1126 = vmatprep.subr.bf16.mxu0 0
      %1127 = vmatpush1.bf16.msra.mxu0 0
      %1128 = vmatprep.mubr.bf16.mxu0 0
      %1129 = vmatmul.mubr.bf16.gmra.mrb[0].mxu0 %v1082
      %v1130 = vpop.f32.mrb[0].mxu0
      %v1131 = vadd.f32 %v1079, %v1130
      %v1132 = vpop.f32.mrb[0].mxu0
      %v1133 = vadd.f32 %v1079, %v1132
      %v1134 = vpop.f32.mrb[0].mxu0
      %v1135 = vpop.f32.mrb[0].mxu0
      %1136 = vdwg.mxu0
      %1137 = vmatprep.subr.bf16.mxu0 %v1094
      %1138 = vmatpush1.bf16.msra.mxu0 %v1091
      %1139 = vmatprep.subr.bf16.mxu0 0
      %1140 = vmatpush1.bf16.msra.mxu0 0
      %1141 = vmatprep.subr.bf16.mxu0 0
      %1142 = vmatpush1.bf16.msra.mxu0 0
      %1143 = vmatprep.subr.bf16.mxu0 0
      %1144 = vmatpush1.bf16.msra.mxu0 0
      %1145 = vmatprep.subr.bf16.mxu0 0
      %1146 = vmatpush1.bf16.msra.mxu0 0
      %1147 = vmatprep.subr.bf16.mxu0 0
      %1148 = vmatpush1.bf16.msra.mxu0 0
      %1149 = vmatprep.subr.bf16.mxu0 0
      %1150 = vmatpush1.bf16.msra.mxu0 0
      %1151 = vmatprep.subr.bf16.mxu0 0
      %1152 = vmatpush1.bf16.msra.mxu0 0
      %1153 = vmatprep.subr.bf16.mxu0 0
      %1154 = vmatpush1.bf16.msra.mxu0 0
      %1155 = vmatprep.subr.bf16.mxu0 0
      %1156 = vmatpush1.bf16.msra.mxu0 0
      %1157 = vmatprep.subr.bf16.mxu0 0
      %1158 = vmatpush1.bf16.msra.mxu0 0
      %1159 = vmatprep.subr.bf16.mxu0 0
      %1160 = vmatpush1.bf16.msra.mxu0 0
      %1161 = vmatprep.subr.bf16.mxu0 0
      %1162 = vmatpush1.bf16.msra.mxu0 0
      %1163 = vmatprep.subr.bf16.mxu0 0
      %1164 = vmatpush1.bf16.msra.mxu0 0
      %1165 = vmatprep.subr.bf16.mxu0 0
      %1166 = vmatpush1.bf16.msra.mxu0 0
      %1167 = vmatprep.subr.bf16.mxu0 0
      %1168 = vmatpush1.bf16.msra.mxu0 0
      %1169 = vmatprep.mubr.bf16.mxu0 0
      %1170 = vmatmul.mubr.bf16.gmra.mrb[0].mxu0 %v1082
      %v1171 = vpop.f32.mrb[0].mxu0
      %v1172 = vadd.f32 %v1079, %v1171
      %v1173 = vpop.f32.mrb[0].mxu0
      %v1174 = vadd.f32 %v1079, %v1173
      %v1175 = vpop.f32.mrb[0].mxu0
      %v1176 = vpop.f32.mrb[0].mxu0
      %1177 = vdwg.mxu0
      %v1178 = vmax.f32 %v1131, 0.0
      %v1179 = vmax.f32 %v1133, 0.0
      %v1180 = vmax.f32 %v1172, 0.0
      %v1181 = vmax.f32 %v1174, 0.0
      %v1186 = vcombine.low %v1178, %v1179
      %v1187 = vcombine.low %v1180, %v1181
      %v1189 = vunpack.c.l.s4 1966171168
      %v1190 = vunpack.c.0.s8 %v1189
      %v1191 = vlaneseq
      %v1192 = vshrl.u32 %v1191, 7
      %v1193 = vsub.s32 %v1190, %v1192
      %v1194 = vrot.slane %v1186, %v1193
      %v1196 = vunpack.c.l.s4 1966171168
      %v1197 = vunpack.c.0.s8 %v1196
      %v1198 = vlaneseq
      %v1199 = vshrl.u32 %v1198, 7
      %v1200 = vsub.s32 %v1197, %v1199
      %v1201 = vrot.slane %v1187, %v1200
      %v1202 = vcombine.low %v1194, %v1201
      %v1204 = vunpack.c.l.s4 1966171168
      %v1205 = vunpack.c.0.s8 %v1204
      %v1206 = vlaneseq
      %v1207 = vshrl.u32 %v1206, 7
      %v1208 = vsub.s32 %v1205, %v1207
      %v1209 = vrot.slane %v1202, %v1208
      %v1211 = vlaneseq
      %vm1212 = vcmp.ge.s32.totalorder %v1211, 0
      %vm1213 = vcmp.lt.s32.totalorder %v1211, 512
      %vm1214 = vmand %vm1212, %vm1213
      %1215 = vst.msk [vmem:[%s334] sm:$0xf] %vm1214, %v1209
      %s1216 = smul.u32 4, %s22
      %p1217 = scmp.lt.s32.totalorder %s1216, 7
      %s1218 = scalar_select %p1217, %s1216, 7
      %s1219 = scalar_lea.vmem %s9, %s1218
      // Predicated region
      $region57: #{feedforward_nn.1} parent=55 // pred_check
        %p1220 = pneg %p234
      $region58: #{feedforward_nn.1} parent=55 // pred_check_branch
        %1222 = sbr.rel (%p1220) target = $region60
      $region59: #{feedforward_nn.1} parent=55 // pred_region
        %s1223 = smul.u32 4, %s22
      $region60: #{feedforward_nn.1} parent=55 // pred_fallthru
        _
    $region56: #{feedforward_nn.1} parent=5 // pred_fallthru
      _
    %p1224 = scmp.le.s32.totalorder 2, %s17
    // Predicated region
    $region61: #{feedforward_nn.1} parent=5 // pred_check
      %p1225 = pneg %p1224
    $region62: #{feedforward_nn.1} parent=5 // pred_check_branch
      %1227 = sbr.rel (%p1225) target = $region64
    $region63: #{feedforward_nn.1} parent=5 // pred_region
      %s1228 = ssub.s32 %s17, 2
      // Predicated region
      $region65: #{feedforward_nn.1} parent=63 // pred_check
        %p1229 = pneg %p240
      $region66: #{feedforward_nn.1} parent=63 // pred_check_branch
        %1231 = sbr.rel (%p1229) target = $region68
      $region67: #{feedforward_nn.1} parent=63 // pred_region
        %s1232 = smul.u32 4, %s23
        %p1233 = scmp.lt.s32.totalorder %s1232, 7
        %s1234 = scalar_select %p1233, %s1232, 7
        %s1235 = scalar_lea.vmem %s9, %s1234
      $region68: #{feedforward_nn.1} parent=63 // pred_fallthru
        _
    $region64: #{feedforward_nn.1} parent=5 // pred_fallthru
      _
  $region6: #{feedforward_nn.1} parent=0 // loop_footer
    %s21 = sadd.s32 1, %s17
  $region7: #{feedforward_nn.1} parent=0 // loop_footer_branch
    %16 = sbr.rel target = $region3
  $region8: #{feedforward_nn.1} parent=0 // loop_exit
    _

</llo_original>
